<compile_context>
chip_gen: v6e
topology: v6e:2x2x1
jax: 0.10.0
libtpu: 0.0.40
codegen_flags: <defaults>
</compile_context>

<pallas_src>
import functools

import jax
import jax.numpy as jnp
from jax.experimental import pallas as pl
from jax.experimental.pallas import tpu as pltpu


def _backbone_update_kernel(s_ref, w_ref, b_ref, o_ref, *, precision):
    # s_ref: (TM, C_s) VMEM tile; w_ref: (C_s, 6); b_ref: (1, 6) f32; o_ref: (TM, 6)
    acc = jnp.dot(
        s_ref[...],
        w_ref[...],
        preferred_element_type=jnp.float32,
        precision=precision,
    )
    o_ref[...] = (acc + b_ref[...]).astype(o_ref.dtype)


# Target bytes per s tile (per pipeline buffer). ~3 MB keeps double-buffered
# VMEM well under the 16 MiB scoped default on v5e while giving TM in the
# 2048-4096 range for C_s=384 (the regime that recovers the HBM roofline).
_TILE_BYTES = 3 * 1024 * 1024


def _round_up(x, m):
    return ((x + m - 1) // m) * m


@jax.jit
def backbone_update(s, weight, bias):
    """BackboneUpdate forward: Linear(c_s, 6)(s).

    s: [..., N_res, C_s]; weight: [C_s, 6] (W^T of the torch Linear); bias: [6].
    Returns [..., N_res, 6] in s.dtype (f32 accumulation on the MXU).
    """
    *lead, c_s = s.shape
    m = 1
    for d in lead:
        m *= d
    s2d = s.reshape(m, c_s)

    itemsize = jnp.dtype(s.dtype).itemsize
    sublane = {4: 8, 2: 16, 1: 32}.get(itemsize, 8)

    # Row-tile cap sized to ~_TILE_BYTES per buffer, rounded down to the
    # dtype's sublane packing (never below one sublane group).
    rows_cap = max(sublane, (_TILE_BYTES // max(c_s * itemsize, 1)) // sublane * sublane)
    # Force at least 2 grid steps so "parallel" shards across both TCs on v7x
    # (a no-op on v5e/v6e, and it also enables input/output pipelining).
    half_rows = _round_up(max(pl.cdiv(m, 2), 1), sublane)
    tm = min(rows_cap, half_rows)
    grid = (pl.cdiv(m, tm),)

    # f32 inputs: full-precision MXU passes (hidden under HBM-bound DMA).
    precision = (
        jax.lax.Precision.HIGHEST if s.dtype == jnp.float32 else jax.lax.Precision.DEFAULT
    )
    kernel = functools.partial(_backbone_update_kernel, precision=precision)

    cost = pl.CostEstimate(
        flops=2 * m * c_s * 6,
        transcendentals=0,
        bytes_accessed=(m * c_s + c_s * 6 + m * 6) * itemsize + 6 * 4,
    )

    bias_f32 = bias.astype(jnp.float32).reshape(1, 6)

    out2d = pl.pallas_call(
        kernel,
        out_shape=jax.ShapeDtypeStruct((m, 6), s.dtype),
        grid=grid,
        in_specs=[
            pl.BlockSpec((tm, c_s), lambda i: (i, 0)),   # streamed row tiles of s
            pl.BlockSpec((c_s, 6), lambda i: (0, 0)),    # weight stays resident
            pl.BlockSpec((1, 6), lambda i: (0, 0)),      # bias (f32) stays resident
        ],
        out_specs=pl.BlockSpec((tm, 6), lambda i: (i, 0)),
        compiler_params=pltpu.CompilerParams(
            dimension_semantics=("parallel",)),           # 2 TCs on v7x share the rows
        cost_estimate=cost,
    )(s2d, weight, bias_f32)

    return out2d.reshape(*lead, 6)


def init_backbone_update_params(c_s, dtype=jnp.float32):
    """Linear(c_s, 6, init='final'): weight = 0, bias = 0 (weight stored as W^T)."""
    weight = jnp.zeros((c_s, 6), dtype=dtype)
    bias = jnp.zeros((6,), dtype=dtype)
    return weight, bias


if __name__ == "__main__":
    key = jax.random.PRNGKey(0)
    k_s, k_w, k_b, k_s2, k_s3 = jax.random.split(key, 5)

    batch, n_res, c_s = 2, 8, 32
    s = jax.random.normal(k_s, (batch, n_res, c_s), dtype=jnp.float32)

    # 1) Exact module semantics at init: init='final' => weight = 0, bias = 0.
    w0, b0 = init_backbone_update_params(c_s)
    out0 = jax.block_until_ready(backbone_update(s, w0, b0))
    assert out0.shape == (batch, n_res, 6)
    assert jnp.allclose(out0, jnp.zeros((batch, n_res, 6), jnp.float32), atol=1e-6)

    # 2) Non-trivial deterministic weights vs. reference matmul.
    w1 = jax.random.normal(k_w, (c_s, 6), dtype=jnp.float32) * 0.1
    b1 = jax.random.normal(k_b, (6,), dtype=jnp.float32) * 0.1
    out1 = jax.block_until_ready(backbone_update(s, w1, b1))
    ref1 = jnp.einsum("bnc,co->bno", s, w1) + b1
    assert jnp.allclose(out1, ref1, atol=1e-4, rtol=1e-4)

    # 3) Rows not a multiple of 8 / of the row tile: exercises the masked
    #    partial edge block (no wrapper-side padding).
    s_odd = jax.random.normal(k_s2, (3, 7, c_s), dtype=jnp.float32)
    out2 = jax.block_until_ready(backbone_update(s_odd, w1, b1))
    ref2 = jnp.einsum("bnc,co->bno", s_odd, w1) + b1
    assert out2.shape == (3, 7, 6)
    assert jnp.allclose(out2, ref2, atol=1e-4, rtol=1e-4)

    # 4) bf16 input path (halves HBM traffic; accumulation stays f32).
    s_bf = s.astype(jnp.bfloat16)
    w_bf = w1.astype(jnp.bfloat16)
    b_bf = b1.astype(jnp.bfloat16)
    out3 = jax.block_until_ready(backbone_update(s_bf, w_bf, b_bf))
    ref3 = (jnp.einsum("bnc,co->bno",
                       s_bf.astype(jnp.float32), w_bf.astype(jnp.float32))
            + b_bf.astype(jnp.float32))
    assert out3.dtype == jnp.bfloat16
    assert jnp.allclose(out3.astype(jnp.float32), ref3, atol=3e-2, rtol=3e-2)

    # 5) Larger row count with a ragged edge: multiple grid steps + the
    #    >=2-step split for TC sharding.
    s_big = jax.random.normal(k_s3, (5, 123, c_s), dtype=jnp.float32)
    out4 = jax.block_until_ready(backbone_update(s_big, w1, b1))
    ref4 = jnp.einsum("bnc,co->bno", s_big, w1) + b1
    assert out4.shape == (5, 123, 6)
    assert jnp.allclose(out4, ref4, atol=1e-4, rtol=1e-4)

    print("KERNEL_OK")
</pallas_src>

<mosaic_0001>
module attributes {stable_mosaic.version = 11 : i64} {
  func.func @_backbone_update_kernel(%arg0: i32, %arg1: memref<8x32xf32, #tpu.memory_space<vmem>>, %arg2: memref<32x6xf32, #tpu.memory_space<vmem>>, %arg3: memref<1x6xf32, #tpu.memory_space<vmem>>, %arg4: memref<8x6xf32, #tpu.memory_space<vmem>>) attributes {dimension_semantics = [#tpu.dimension_semantics<parallel>], iteration_bounds = array<i64: 2>, scalar_prefetch = 0 : i64, scratch_operands = 0 : i64, tpu.core_type = #tpu.core_type<tc>, window_params = [{transform_indices = @transform_0, window_bounds = array<i64: 8, 32>}, {pipeline_mode = #tpu.pipeline_mode<synchronous>, transform_indices = @transform_1, window_bounds = array<i64: 32, 6>}, {pipeline_mode = #tpu.pipeline_mode<synchronous>, transform_indices = @transform_2, window_bounds = array<i64: 1, 6>}, {transform_indices = @transform_3, window_bounds = array<i64: 8, 6>}]} {
    %c0 = arith.constant 0 : index
    %c0_0 = arith.constant 0 : index
    %0 = vector.load %arg1[%c0, %c0_0] : memref<8x32xf32, #tpu.memory_space<vmem>>, vector<8x32xf32>
    %c0_1 = arith.constant 0 : index
    %c0_2 = arith.constant 0 : index
    %1 = vector.load %arg2[%c0_1, %c0_2] : memref<32x6xf32, #tpu.memory_space<vmem>>, vector<32x6xf32>
    %cst = arith.constant dense<0.000000e+00> : vector<8x6xf32>
    %2 = tpu.matmul %0, %1, %cst {dimension_numbers = #tpu.dot_dimension_numbers<[1], [0], [0], [1], [0, 0, 1, 1], [], []>, precision = #tpu.contract_precision<fp32>} : vector<8x32xf32>, vector<32x6xf32>, vector<8x6xf32> -> vector<8x6xf32>
    %c0_3 = arith.constant 0 : index
    %c0_4 = arith.constant 0 : index
    %3 = vector.load %arg3[%c0_3, %c0_4] : memref<1x6xf32, #tpu.memory_space<vmem>>, vector<1x6xf32>
    %4 = vector.broadcast %3 : vector<1x6xf32> to vector<8x6xf32>
    %5 = arith.addf %2, %4 : vector<8x6xf32>
    %c0_5 = arith.constant 0 : index
    %c0_6 = arith.constant 0 : index
    %6 = vector.load %arg4[%c0_5, %c0_6] : memref<8x6xf32, #tpu.memory_space<vmem>>, vector<8x6xf32>
    tpu.vector_store %arg4[%c0_5, %c0_6], %5 {strides = array<i32>} : memref<8x6xf32, #tpu.memory_space<vmem>>, vector<8x6xf32>,
    return
  }
  func.func @transform_0(%arg0: i32) -> (i32, i32) {
    %c0_i32 = arith.constant 0 : i32
    %c0_i32_0 = arith.constant 0 : i32
    return %arg0, %c0_i32 : i32, i32
  }
  func.func @transform_1(%arg0: i32) -> (i32, i32) {
    %c0_i32 = arith.constant 0 : i32
    %c0_i32_0 = arith.constant 0 : i32
    %c0_i32_1 = arith.constant 0 : i32
    return %c0_i32, %c0_i32_0 : i32, i32
  }
  func.func @transform_2(%arg0: i32) -> (i32, i32) {
    %c0_i32 = arith.constant 0 : i32
    %c0_i32_0 = arith.constant 0 : i32
    %c0_i32_1 = arith.constant 0 : i32
    return %c0_i32, %c0_i32_0 : i32, i32
  }
  func.func @transform_3(%arg0: i32) -> (i32, i32) {
    %c0_i32 = arith.constant 0 : i32
    %c0_i32_0 = arith.constant 0 : i32
    return %arg0, %c0_i32 : i32, i32
  }
}

</mosaic_0001>

<llo_original>
// kernel: backbone_update.1
$region0: #{backbone_update.1}
  #allocation0 [shape = 'u32[]', space=smem, size = 0x4, offset = 0x4, fixed_abs, tag = 'smem constant byte address 0x4 - core index']
  #allocation1 [shape = 'u32[144,128]{1,0:T(1,128)}', space=vmem, size = 0x12000, scoped, tag = 'internal scratch']
  %s0 = inlined_call_operand.vmem [shape: f32[16,32], index: 0, kind: input, shape index: {}]
  %s1 = inlined_call_operand.vmem [shape: f32[32,6], index: 1, kind: input, shape index: {}]
  %s2 = inlined_call_operand.vmem [shape: f32[1,6], index: 2, kind: input, shape index: {}]
  %s3 = inlined_call_operand.vmem [shape: f32[16,6], index: 3, kind: output, shape index: {}]
  %s4 = sld [smem:[#allocation0]]
  $region45: #{backbone_update.1} parent=0
    _
  %s6 = ssub.s32 1, %s4
  %s7 = scalar_select 0, %s6, %s4
  loop: start=0, step=1, limit=4
  $region2: #{backbone_update.1} parent=0 // loop_pre_header
    _
  $region3: #{backbone_update.1} parent=0 // loop_header
    %s9 = sphi 0, %s13
    %p10 = scmp.ge.s32.totalorder %s9, 4
    %s19 = sphi 0, %s21
    %s22 = sphi 0, %s19
    %s23 = sphi 0, %s22
    %s39 = sphi 0, %s23
    %s43 = sphi 0, %s43
    %s45 = sphi 0, %s43
    %s46 = sphi 0, %s45
    %s60 = sphi 0, %s46
    %s64 = sphi 0, %s64
    %s66 = sphi 0, %s64
    %s67 = sphi 0, %s66
    %s81 = sphi 0, %s67
    %s87 = sphi 0, %s89
    %s90 = sphi 0, %s87
    %s91 = sphi 0, %s90
    %s107 = sphi 0, %s91
  $region4: #{backbone_update.1} parent=0 // loop_header_branch
    %12 = sbr.rel (%p10) target = $region8
  $region5: #{backbone_update.1} parent=0 // loop_body
    %s14 = ssub.s32 %s9, 1
    %s15 = ssub.s32 %s9, 2
    %s16 = sadd.s32 %s9, 1
    %s17 = ssub.s32 %s9, %s16
    %p18 = scmp.eq.s32.totalorder %s17, 0
    %s20 = sadd.s32 %s19, 1
    %s21 = scalar_select %p18, %s19, %s20
    %p24 = pneg %p18
    %p25 = scmp.eq.s32.totalorder %s9, 1
    %p26 = por %p24, %p25
    %p27 = scmp.ne.s32.totalorder %s19, %s22
    %p28 = scmp.eq.s32.totalorder %s9, 0
    %p29 = por %p27, %p28
    %p30 = scmp.ne.s32.totalorder %s19, %s22
    %p31 = scmp.eq.s32.totalorder %s14, 1
    %p32 = por %p30, %p31
    %p33 = scmp.ne.s32.totalorder %s22, %s23
    %p34 = scmp.eq.s32.totalorder %s14, 0
    %p35 = por %p33, %p34
    %p36 = scmp.ne.s32.totalorder %s22, %s23
    %p37 = scmp.eq.s32.totalorder %s15, 1
    %p38 = por %p36, %p37
    %p40 = scmp.ne.s32.totalorder %s23, %s39
    %p41 = scmp.eq.s32.totalorder %s15, 0
    %p42 = por %p40, %p41
    %s44 = sadd.s32 %s43, 1
    %p47 = scmp.eq.s32.totalorder %s9, 1
    %p48 = scmp.ne.s32.totalorder %s43, %s45
    %p49 = scmp.eq.s32.totalorder %s9, 0
    %p50 = por %p48, %p49
    %p51 = scmp.ne.s32.totalorder %s43, %s45
    %p52 = scmp.eq.s32.totalorder %s14, 1
    %p53 = por %p51, %p52
    %p54 = scmp.ne.s32.totalorder %s45, %s46
    %p55 = scmp.eq.s32.totalorder %s14, 0
    %p56 = por %p54, %p55
    %p57 = scmp.ne.s32.totalorder %s45, %s46
    %p58 = scmp.eq.s32.totalorder %s15, 1
    %p59 = por %p57, %p58
    %p61 = scmp.ne.s32.totalorder %s46, %s60
    %p62 = scmp.eq.s32.totalorder %s15, 0
    %p63 = por %p61, %p62
    %s65 = sadd.s32 %s64, 1
    %p68 = scmp.eq.s32.totalorder %s9, 1
    %p69 = scmp.ne.s32.totalorder %s64, %s66
    %p70 = scmp.eq.s32.totalorder %s9, 0
    %p71 = por %p69, %p70
    %p72 = scmp.ne.s32.totalorder %s64, %s66
    %p73 = scmp.eq.s32.totalorder %s14, 1
    %p74 = por %p72, %p73
    %p75 = scmp.ne.s32.totalorder %s66, %s67
    %p76 = scmp.eq.s32.totalorder %s14, 0
    %p77 = por %p75, %p76
    %p78 = scmp.ne.s32.totalorder %s66, %s67
    %p79 = scmp.eq.s32.totalorder %s15, 1
    %p80 = por %p78, %p79
    %p82 = scmp.ne.s32.totalorder %s67, %s81
    %p83 = scmp.eq.s32.totalorder %s15, 0
    %p84 = por %p82, %p83
    %s85 = ssub.s32 %s9, %s16
    %p86 = scmp.eq.s32.totalorder %s85, 0
    %s88 = sadd.s32 %s87, 1
    %s89 = scalar_select %p86, %s87, %s88
    %p92 = pneg %p86
    %p93 = scmp.eq.s32.totalorder %s9, 1
    %p94 = por %p92, %p93
    %p95 = scmp.ne.s32.totalorder %s87, %s90
    %p96 = scmp.eq.s32.totalorder %s9, 0
    %p97 = por %p95, %p96
    %p98 = scmp.ne.s32.totalorder %s87, %s90
    %p99 = scmp.eq.s32.totalorder %s14, 1
    %p100 = por %p98, %p99
    %p101 = scmp.ne.s32.totalorder %s90, %s91
    %p102 = scmp.eq.s32.totalorder %s14, 0
    %p103 = por %p101, %p102
    %p104 = scmp.ne.s32.totalorder %s90, %s91
    %p105 = scmp.eq.s32.totalorder %s15, 1
    %p106 = por %p104, %p105
    %p108 = scmp.ne.s32.totalorder %s91, %s107
    %p109 = scmp.eq.s32.totalorder %s15, 0
    %p110 = por %p108, %p109
    %p111 = scmp.le.s32.totalorder 1, %s9
    %p112 = scmp.lt.s32.totalorder %s9, 3
    %p113 = pnand %p111, %p112
    %p114 = pneg %p113
    // Predicated region
    $region9: #{backbone_update.1} parent=5 // pred_check
      _
    $region10: #{backbone_update.1} parent=5 // pred_check_branch
      %116 = sbr.rel (%p113) target = $region12
    $region11: #{backbone_update.1} parent=5 // pred_region
      %s117 = ssub.s32 %s9, 1
      // Predicated region
      $region13: #{backbone_update.1} parent=11 // pred_check
        %p118 = pneg %p56
      $region14: #{backbone_update.1} parent=11 // pred_check_branch
        %120 = sbr.rel (%p118) target = $region16
      $region15: #{backbone_update.1} parent=11 // pred_region
        _
      $region16: #{backbone_update.1} parent=11 // pred_fallthru
        _
      // Predicated region
      $region17: #{backbone_update.1} parent=11 // pred_check
        %p121 = pneg %p77
      $region18: #{backbone_update.1} parent=11 // pred_check_branch
        %123 = sbr.rel (%p121) target = $region20
      $region19: #{backbone_update.1} parent=11 // pred_region
        _
      $region20: #{backbone_update.1} parent=11 // pred_fallthru
        _
    $region12: #{backbone_update.1} parent=5 // pred_fallthru
      _
    %p124 = scmp.lt.s32.totalorder %s9, 2
    // Predicated region
    $region21: #{backbone_update.1} parent=5 // pred_check
      %p125 = pneg %p124
    $region22: #{backbone_update.1} parent=5 // pred_check_branch
      %127 = sbr.rel (%p125) target = $region24
    $region23: #{backbone_update.1} parent=5 // pred_region
      // Predicated region
      $region25: #{backbone_update.1} parent=23 // pred_check
        %p128 = pneg %p29
      $region26: #{backbone_update.1} parent=23 // pred_check_branch
        %130 = sbr.rel (%p128) target = $region28
      $region27: #{backbone_update.1} parent=23 // pred_region
        %p131 = scmp.lt.s32.totalorder %s9, 1
        %s132 = scalar_select %p131, %s9, 1
        %s133 = smul.addr %s132, 8
        %s134 = scalar_lea.vmem %s0, %s133
      $region28: #{backbone_update.1} parent=23 // pred_fallthru
        _
    $region24: #{backbone_update.1} parent=5 // pred_fallthru
      _
    %p135 = scmp.le.s32.totalorder 1, %s9
    %p136 = scmp.lt.s32.totalorder %s9, 3
    %p137 = pnand %p135, %p136
    %p138 = pneg %p137
    // Predicated region
    $region29: #{backbone_update.1} parent=5 // pred_check
      _
    $region30: #{backbone_update.1} parent=5 // pred_check_branch
      %140 = sbr.rel (%p137) target = $region32
    $region31: #{backbone_update.1} parent=5 // pred_region
      %s141 = ssub.s32 %s9, 1
      %p142 = scmp.lt.s32.totalorder %s14, 1
      %s143 = scalar_select %p142, %s14, 1
      %s144 = smul.addr %s143, 8
      %s145 = scalar_lea.vmem %s0, %s144
      %p146 = pneg %p35
      %p147 = pneg %p32
      %p148 = pneg %p56
      %p149 = pneg %p53
      %p150 = pneg %p77
      %p151 = pneg %p74
      %p152 = pneg %p103
      %p153 = pneg %p100
      %p154 = scmp.lt.s32.totalorder %s14, 1
      %s155 = scalar_select %p154, %s14, 1
      %s156 = smul.addr %s155, 8
      %s157 = scalar_lea.vmem %s3, %s156
      %p158 = scmp.lt.s32.totalorder %s14, 1
      %s159 = scalar_select %p158, %s14, 1
      %s160 = smul.addr %s159, 8
      %s161 = scalar_lea.vmem %s0, %s160
      %p162 = scmp.lt.s32.totalorder %s14, 1
      %s163 = scalar_select %p162, %s14, 1
      %s164 = smul.addr %s163, 8
      %s165 = scalar_lea.vmem %s3, %s164
      %v166 = vld [vmem:[%s161] sm:$0xff]
      %v167 = vld [vmem:[%s1] sm:$0xff]
      %v168 = vld [vmem:[%s1 + $0x8] sm:$0xff]
      %v169 = vld [vmem:[%s1 + $0x10] sm:$0xff]
      %v170 = vld [vmem:[%s1 + $0x18] sm:$0xff]
      %v171 = vld [vmem:[%s2] sm:$0x1]
      %v173 = vlaneseq
      %v174 = vshrl.u32 %v173, 7
      %v175 = vsub.s32 0, %v174
      %v176 = vrot.slane %v171, %v175
      %vm178 = vcmask 261120
      %v180 = vsel %vm178, %v166, 0
      %182 = vmatprep.subr.mxu0 0.0
      %183 = vmatpush1.msra.mxu0 0.0
      %184 = vmatprep.subr.mxu0 0.0
      %185 = vmatpush1.msra.mxu0 0.0
      %186 = vmatprep.subr.mxu0 0.0
      %187 = vmatpush1.msra.mxu0 0.0
      %188 = vmatprep.subr.mxu0 0.0
      %189 = vmatpush1.msra.mxu0 0.0
      %190 = vmatprep.subr.mxu0 0.0
      %191 = vmatpush1.msra.mxu0 0.0
      %192 = vmatprep.subr.mxu0 0.0
      %193 = vmatpush1.msra.mxu0 0.0
      %194 = vmatprep.subr.mxu0 0.0
      %195 = vmatpush1.msra.mxu0 0.0
      %196 = vmatprep.subr.mxu0 0.0
      %197 = vmatpush1.msra.mxu0 0.0
      %198 = vmatprep.subr.mxu0 0.0
      %199 = vmatpush1.msra.mxu0 0.0
      %200 = vmatprep.subr.mxu0 0.0
      %201 = vmatpush1.msra.mxu0 0.0
      %202 = vmatprep.subr.mxu0 0.0
      %203 = vmatpush1.msra.mxu0 0.0
      %204 = vmatprep.subr.mxu0 0.0
      %205 = vmatpush1.msra.mxu0 0.0
      %206 = vmatprep.subr.mxu0 0.0
      %v207 = vand.u32 %v170, 4294901760
      %208 = vmatpush1.msra.mxu0 %v207
      %209 = vmatprep.subr.mxu0 0.0
      %v210 = vand.u32 %v169, 4294901760
      %211 = vmatpush1.msra.mxu0 %v210
      %212 = vmatprep.subr.mxu0 0.0
      %v213 = vand.u32 %v168, 4294901760
      %214 = vmatpush1.msra.mxu0 %v213
      %215 = vmatprep.subr.mxu0 0.0
      %v216 = vand.u32 %v167, 4294901760
      %217 = vmatpush1.msra.mxu0 %v216
      %218 = vmatprep.subr.mxu0 0.0
      %219 = vmatpush2.msra.mxu0 0.0
      %220 = vmatprep.subr.mxu0 0.0
      %221 = vmatpush2.msra.mxu0 0.0
      %222 = vmatprep.subr.mxu0 0.0
      %223 = vmatpush2.msra.mxu0 0.0
      %224 = vmatprep.subr.mxu0 0.0
      %225 = vmatpush2.msra.mxu0 0.0
      %226 = vmatprep.subr.mxu0 0.0
      %227 = vmatpush2.msra.mxu0 0.0
      %228 = vmatprep.subr.mxu0 0.0
      %229 = vmatpush2.msra.mxu0 0.0
      %230 = vmatprep.subr.mxu0 0.0
      %231 = vmatpush2.msra.mxu0 0.0
      %232 = vmatprep.subr.mxu0 0.0
      %233 = vmatpush2.msra.mxu0 0.0
      %234 = vmatprep.subr.mxu0 0.0
      %235 = vmatpush2.msra.mxu0 0.0
      %236 = vmatprep.subr.mxu0 0.0
      %237 = vmatpush2.msra.mxu0 0.0
      %238 = vmatprep.subr.mxu0 0.0
      %239 = vmatpush2.msra.mxu0 0.0
      %240 = vmatprep.subr.mxu0 0.0
      %241 = vmatpush2.msra.mxu0 0.0
      %242 = vmatprep.subr.mxu0 0.0
      %243 = vmatpush2.msra.mxu0 0.0
      %244 = vmatprep.subr.mxu0 0.0
      %245 = vmatpush2.msra.mxu0 0.0
      %246 = vmatprep.subr.mxu0 0.0
      %247 = vmatpush2.msra.mxu0 0.0
      %248 = vmatprep.subr.mxu0 0.0
      %249 = vmatpush2.msra.mxu0 0.0
      %250 = vmatprep.mubr.f32.mxu0 0.0
      %v251 = vand.u32 %v180, 4294901760
      %v252 = vsub.f32 %v180, %v251
      %v253 = vand.u32 %v252, 4294901760
      %v254 = vsub.f32 %v252, %v253
      %v255 = vand.u32 %v254, 4294901760
      %256 = vmatmul.mubr.f32.gmra.mxu0 %v255
      %v257 = vpop.f32.mrf.mxu0
      %v258 = vadd.f32 %v176, %v257
      %v259 = vpop.f32.mrf.mxu0
      %260 = vdwg.mxu0
      %261 = vmatprep.subr.mxu0 0.0
      %262 = vmatpush1.msra.mxu0 0.0
      %263 = vmatprep.subr.mxu0 0.0
      %264 = vmatpush1.msra.mxu0 0.0
      %265 = vmatprep.subr.mxu0 0.0
      %266 = vmatpush1.msra.mxu0 0.0
      %267 = vmatprep.subr.mxu0 0.0
      %268 = vmatpush1.msra.mxu0 0.0
      %269 = vmatprep.subr.mxu0 0.0
      %270 = vmatpush1.msra.mxu0 0.0
      %271 = vmatprep.subr.mxu0 0.0
      %272 = vmatpush1.msra.mxu0 0.0
      %273 = vmatprep.subr.mxu0 0.0
      %274 = vmatpush1.msra.mxu0 0.0
      %275 = vmatprep.subr.mxu0 0.0
      %276 = vmatpush1.msra.mxu0 0.0
      %277 = vmatprep.subr.mxu0 0.0
      %278 = vmatpush1.msra.mxu0 0.0
      %279 = vmatprep.subr.mxu0 0.0
      %280 = vmatpush1.msra.mxu0 0.0
      %281 = vmatprep.subr.mxu0 0.0
      %282 = vmatpush1.msra.mxu0 0.0
      %283 = vmatprep.subr.mxu0 0.0
      %284 = vmatpush1.msra.mxu0 0.0
      %285 = vmatprep.subr.mxu0 0.0
      %v286 = vand.u32 %v170, 4294901760
      %v287 = vsub.f32 %v170, %v286
      %v288 = vand.u32 %v287, 4294901760
      %v289 = vsub.f32 %v287, %v288
      %v290 = vand.u32 %v289, 4294901760
      %291 = vmatpush1.msra.mxu0 %v290
      %292 = vmatprep.subr.mxu0 0.0
      %v293 = vand.u32 %v169, 4294901760
      %v294 = vsub.f32 %v169, %v293
      %v295 = vand.u32 %v294, 4294901760
      %v296 = vsub.f32 %v294, %v295
      %v297 = vand.u32 %v296, 4294901760
      %298 = vmatpush1.msra.mxu0 %v297
      %299 = vmatprep.subr.mxu0 0.0
      %v300 = vand.u32 %v168, 4294901760
      %v301 = vsub.f32 %v168, %v300
      %v302 = vand.u32 %v301, 4294901760
      %v303 = vsub.f32 %v301, %v302
      %v304 = vand.u32 %v303, 4294901760
      %305 = vmatpush1.msra.mxu0 %v304
      %306 = vmatprep.subr.mxu0 0.0
      %v307 = vand.u32 %v167, 4294901760
      %v308 = vsub.f32 %v167, %v307
      %v309 = vand.u32 %v308, 4294901760
      %v310 = vsub.f32 %v308, %v309
      %v311 = vand.u32 %v310, 4294901760
      %312 = vmatpush1.msra.mxu0 %v311
      %313 = vmatprep.subr.mxu0 0.0
      %314 = vmatpush2.msra.mxu0 0.0
      %315 = vmatprep.subr.mxu0 0.0
      %316 = vmatpush2.msra.mxu0 0.0
      %317 = vmatprep.subr.mxu0 0.0
      %318 = vmatpush2.msra.mxu0 0.0
      %319 = vmatprep.subr.mxu0 0.0
      %320 = vmatpush2.msra.mxu0 0.0
      %321 = vmatprep.subr.mxu0 0.0
      %322 = vmatpush2.msra.mxu0 0.0
      %323 = vmatprep.subr.mxu0 0.0
      %324 = vmatpush2.msra.mxu0 0.0
      %325 = vmatprep.subr.mxu0 0.0
      %326 = vmatpush2.msra.mxu0 0.0
      %327 = vmatprep.subr.mxu0 0.0
      %328 = vmatpush2.msra.mxu0 0.0
      %329 = vmatprep.subr.mxu0 0.0
      %330 = vmatpush2.msra.mxu0 0.0
      %331 = vmatprep.subr.mxu0 0.0
      %332 = vmatpush2.msra.mxu0 0.0
      %333 = vmatprep.subr.mxu0 0.0
      %334 = vmatpush2.msra.mxu0 0.0
      %335 = vmatprep.subr.mxu0 0.0
      %336 = vmatpush2.msra.mxu0 0.0
      %337 = vmatprep.subr.mxu0 0.0
      %338 = vmatpush2.msra.mxu0 0.0
      %339 = vmatprep.subr.mxu0 0.0
      %340 = vmatpush2.msra.mxu0 0.0
      %341 = vmatprep.subr.mxu0 0.0
      %342 = vmatpush2.msra.mxu0 0.0
      %343 = vmatprep.subr.mxu0 0.0
      %344 = vmatpush2.msra.mxu0 0.0
      %345 = vmatprep.mubr.f32.mxu0 0.0
      %v346 = vand.u32 %v180, 4294901760
      %347 = vmatmul.mubr.f32.gmra.mxu0 %v346
      %v348 = vpop.f32.mrf.mxu0
      %v349 = vadd.f32 %v258, %v348
      %v350 = vpop.f32.mrf.mxu0
      %351 = vdwg.mxu0
      %352 = vmatprep.subr.mxu0 0.0
      %353 = vmatpush1.msra.mxu0 0.0
      %354 = vmatprep.subr.mxu0 0.0
      %355 = vmatpush1.msra.mxu0 0.0
      %356 = vmatprep.subr.mxu0 0.0
      %357 = vmatpush1.msra.mxu0 0.0
      %358 = vmatprep.subr.mxu0 0.0
      %359 = vmatpush1.msra.mxu0 0.0
      %360 = vmatprep.subr.mxu0 0.0
      %361 = vmatpush1.msra.mxu0 0.0
      %362 = vmatprep.subr.mxu0 0.0
      %363 = vmatpush1.msra.mxu0 0.0
      %364 = vmatprep.subr.mxu0 0.0
      %365 = vmatpush1.msra.mxu0 0.0
      %366 = vmatprep.subr.mxu0 0.0
      %367 = vmatpush1.msra.mxu0 0.0
      %368 = vmatprep.subr.mxu0 0.0
      %369 = vmatpush1.msra.mxu0 0.0
      %370 = vmatprep.subr.mxu0 0.0
      %371 = vmatpush1.msra.mxu0 0.0
      %372 = vmatprep.subr.mxu0 0.0
      %373 = vmatpush1.msra.mxu0 0.0
      %374 = vmatprep.subr.mxu0 0.0
      %375 = vmatpush1.msra.mxu0 0.0
      %376 = vmatprep.subr.mxu0 0.0
      %v377 = vand.u32 %v170, 4294901760
      %v378 = vsub.f32 %v170, %v377
      %379 = vmatpush1.msra.mxu0 %v378
      %380 = vmatprep.subr.mxu0 0.0
      %v381 = vand.u32 %v169, 4294901760
      %v382 = vsub.f32 %v169, %v381
      %383 = vmatpush1.msra.mxu0 %v382
      %384 = vmatprep.subr.mxu0 0.0
      %v385 = vand.u32 %v168, 4294901760
      %v386 = vsub.f32 %v168, %v385
      %387 = vmatpush1.msra.mxu0 %v386
      %388 = vmatprep.subr.mxu0 0.0
      %v389 = vand.u32 %v167, 4294901760
      %v390 = vsub.f32 %v167, %v389
      %391 = vmatpush1.msra.mxu0 %v390
      %392 = vmatprep.subr.mxu0 0.0
      %393 = vmatpush2.msra.mxu0 0.0
      %394 = vmatprep.subr.mxu0 0.0
      %395 = vmatpush2.msra.mxu0 0.0
      %396 = vmatprep.subr.mxu0 0.0
      %397 = vmatpush2.msra.mxu0 0.0
      %398 = vmatprep.subr.mxu0 0.0
      %399 = vmatpush2.msra.mxu0 0.0
      %400 = vmatprep.subr.mxu0 0.0
      %401 = vmatpush2.msra.mxu0 0.0
      %402 = vmatprep.subr.mxu0 0.0
      %403 = vmatpush2.msra.mxu0 0.0
      %404 = vmatprep.subr.mxu0 0.0
      %405 = vmatpush2.msra.mxu0 0.0
      %406 = vmatprep.subr.mxu0 0.0
      %407 = vmatpush2.msra.mxu0 0.0
      %408 = vmatprep.subr.mxu0 0.0
      %409 = vmatpush2.msra.mxu0 0.0
      %410 = vmatprep.subr.mxu0 0.0
      %411 = vmatpush2.msra.mxu0 0.0
      %412 = vmatprep.subr.mxu0 0.0
      %413 = vmatpush2.msra.mxu0 0.0
      %414 = vmatprep.subr.mxu0 0.0
      %415 = vmatpush2.msra.mxu0 0.0
      %416 = vmatprep.subr.mxu0 0.0
      %417 = vmatpush2.msra.mxu0 0.0
      %418 = vmatprep.subr.mxu0 0.0
      %419 = vmatpush2.msra.mxu0 0.0
      %420 = vmatprep.subr.mxu0 0.0
      %421 = vmatpush2.msra.mxu0 0.0
      %422 = vmatprep.subr.mxu0 0.0
      %423 = vmatpush2.msra.mxu0 0.0
      %424 = vmatprep.mubr.f32.mxu0 0.0
      %v425 = vand.u32 %v180, 4294901760
      %v426 = vsub.f32 %v180, %v425
      %427 = vmatmul.mubr.f32.gmra.mxu0 %v426
      %v428 = vpop.f32.mrf.mxu0
      %v429 = vadd.f32 %v349, %v428
      %v430 = vpop.f32.mrf.mxu0
      %431 = vdwg.mxu0
      %432 = vmatprep.subr.mxu0 0.0
      %433 = vmatpush1.msra.mxu0 0.0
      %434 = vmatprep.subr.mxu0 0.0
      %435 = vmatpush1.msra.mxu0 0.0
      %436 = vmatprep.subr.mxu0 0.0
      %437 = vmatpush1.msra.mxu0 0.0
      %438 = vmatprep.subr.mxu0 0.0
      %439 = vmatpush1.msra.mxu0 0.0
      %440 = vmatprep.subr.mxu0 0.0
      %441 = vmatpush1.msra.mxu0 0.0
      %442 = vmatprep.subr.mxu0 0.0
      %443 = vmatpush1.msra.mxu0 0.0
      %444 = vmatprep.subr.mxu0 0.0
      %445 = vmatpush1.msra.mxu0 0.0
      %446 = vmatprep.subr.mxu0 0.0
      %447 = vmatpush1.msra.mxu0 0.0
      %448 = vmatprep.subr.mxu0 0.0
      %449 = vmatpush1.msra.mxu0 0.0
      %450 = vmatprep.subr.mxu0 0.0
      %451 = vmatpush1.msra.mxu0 0.0
      %452 = vmatprep.subr.mxu0 0.0
      %453 = vmatpush1.msra.mxu0 0.0
      %454 = vmatprep.subr.mxu0 0.0
      %455 = vmatpush1.msra.mxu0 0.0
      %456 = vmatprep.subr.mxu0 0.0
      %v457 = vand.u32 %v170, 4294901760
      %458 = vmatpush1.msra.mxu0 %v457
      %459 = vmatprep.subr.mxu0 0.0
      %v460 = vand.u32 %v169, 4294901760
      %461 = vmatpush1.msra.mxu0 %v460
      %462 = vmatprep.subr.mxu0 0.0
      %v463 = vand.u32 %v168, 4294901760
      %464 = vmatpush1.msra.mxu0 %v463
      %465 = vmatprep.subr.mxu0 0.0
      %v466 = vand.u32 %v167, 4294901760
      %467 = vmatpush1.msra.mxu0 %v466
      %468 = vmatprep.subr.mxu0 0.0
      %469 = vmatpush2.msra.mxu0 0.0
      %470 = vmatprep.subr.mxu0 0.0
      %471 = vmatpush2.msra.mxu0 0.0
      %472 = vmatprep.subr.mxu0 0.0
      %473 = vmatpush2.msra.mxu0 0.0
      %474 = vmatprep.subr.mxu0 0.0
      %475 = vmatpush2.msra.mxu0 0.0
      %476 = vmatprep.subr.mxu0 0.0
      %477 = vmatpush2.msra.mxu0 0.0
      %478 = vmatprep.subr.mxu0 0.0
      %479 = vmatpush2.msra.mxu0 0.0
      %480 = vmatprep.subr.mxu0 0.0
      %481 = vmatpush2.msra.mxu0 0.0
      %482 = vmatprep.subr.mxu0 0.0
      %483 = vmatpush2.msra.mxu0 0.0
      %484 = vmatprep.subr.mxu0 0.0
      %485 = vmatpush2.msra.mxu0 0.0
      %486 = vmatprep.subr.mxu0 0.0
      %487 = vmatpush2.msra.mxu0 0.0
      %488 = vmatprep.subr.mxu0 0.0
      %489 = vmatpush2.msra.mxu0 0.0
      %490 = vmatprep.subr.mxu0 0.0
      %491 = vmatpush2.msra.mxu0 0.0
      %492 = vmatprep.subr.mxu0 0.0
      %493 = vmatpush2.msra.mxu0 0.0
      %494 = vmatprep.subr.mxu0 0.0
      %495 = vmatpush2.msra.mxu0 0.0
      %496 = vmatprep.subr.mxu0 0.0
      %497 = vmatpush2.msra.mxu0 0.0
      %498 = vmatprep.subr.mxu0 0.0
      %499 = vmatpush2.msra.mxu0 0.0
      %500 = vmatprep.mubr.f32.mxu0 0.0
      %v501 = vand.u32 %v180, 4294901760
      %v502 = vsub.f32 %v180, %v501
      %v503 = vand.u32 %v502, 4294901760
      %504 = vmatmul.mubr.f32.gmra.mxu0 %v503
      %v505 = vpop.f32.mrf.mxu0
      %v506 = vadd.f32 %v429, %v505
      %v507 = vpop.f32.mrf.mxu0
      %508 = vdwg.mxu0
      %509 = vmatprep.subr.mxu0 0.0
      %510 = vmatpush1.msra.mxu0 0.0
      %511 = vmatprep.subr.mxu0 0.0
      %512 = vmatpush1.msra.mxu0 0.0
      %513 = vmatprep.subr.mxu0 0.0
      %514 = vmatpush1.msra.mxu0 0.0
      %515 = vmatprep.subr.mxu0 0.0
      %516 = vmatpush1.msra.mxu0 0.0
      %517 = vmatprep.subr.mxu0 0.0
      %518 = vmatpush1.msra.mxu0 0.0
      %519 = vmatprep.subr.mxu0 0.0
      %520 = vmatpush1.msra.mxu0 0.0
      %521 = vmatprep.subr.mxu0 0.0
      %522 = vmatpush1.msra.mxu0 0.0
      %523 = vmatprep.subr.mxu0 0.0
      %524 = vmatpush1.msra.mxu0 0.0
      %525 = vmatprep.subr.mxu0 0.0
      %526 = vmatpush1.msra.mxu0 0.0
      %527 = vmatprep.subr.mxu0 0.0
      %528 = vmatpush1.msra.mxu0 0.0
      %529 = vmatprep.subr.mxu0 0.0
      %530 = vmatpush1.msra.mxu0 0.0
      %531 = vmatprep.subr.mxu0 0.0
      %532 = vmatpush1.msra.mxu0 0.0
      %533 = vmatprep.subr.mxu0 0.0
      %v534 = vand.u32 %v170, 4294901760
      %v535 = vsub.f32 %v170, %v534
      %v536 = vand.u32 %v535, 4294901760
      %537 = vmatpush1.msra.mxu0 %v536
      %538 = vmatprep.subr.mxu0 0.0
      %v539 = vand.u32 %v169, 4294901760
      %v540 = vsub.f32 %v169, %v539
      %v541 = vand.u32 %v540, 4294901760
      %542 = vmatpush1.msra.mxu0 %v541
      %543 = vmatprep.subr.mxu0 0.0
      %v544 = vand.u32 %v168, 4294901760
      %v545 = vsub.f32 %v168, %v544
      %v546 = vand.u32 %v545, 4294901760
      %547 = vmatpush1.msra.mxu0 %v546
      %548 = vmatprep.subr.mxu0 0.0
      %v549 = vand.u32 %v167, 4294901760
      %v550 = vsub.f32 %v167, %v549
      %v551 = vand.u32 %v550, 4294901760
      %552 = vmatpush1.msra.mxu0 %v551
      %553 = vmatprep.subr.mxu0 0.0
      %554 = vmatpush2.msra.mxu0 0.0
      %555 = vmatprep.subr.mxu0 0.0
      %556 = vmatpush2.msra.mxu0 0.0
      %557 = vmatprep.subr.mxu0 0.0
      %558 = vmatpush2.msra.mxu0 0.0
      %559 = vmatprep.subr.mxu0 0.0
      %560 = vmatpush2.msra.mxu0 0.0
      %561 = vmatprep.subr.mxu0 0.0
      %562 = vmatpush2.msra.mxu0 0.0
      %563 = vmatprep.subr.mxu0 0.0
      %564 = vmatpush2.msra.mxu0 0.0
      %565 = vmatprep.subr.mxu0 0.0
      %566 = vmatpush2.msra.mxu0 0.0
      %567 = vmatprep.subr.mxu0 0.0
      %568 = vmatpush2.msra.mxu0 0.0
      %569 = vmatprep.subr.mxu0 0.0
      %570 = vmatpush2.msra.mxu0 0.0
      %571 = vmatprep.subr.mxu0 0.0
      %572 = vmatpush2.msra.mxu0 0.0
      %573 = vmatprep.subr.mxu0 0.0
      %574 = vmatpush2.msra.mxu0 0.0
      %575 = vmatprep.subr.mxu0 0.0
      %576 = vmatpush2.msra.mxu0 0.0
      %577 = vmatprep.subr.mxu0 0.0
      %578 = vmatpush2.msra.mxu0 0.0
      %579 = vmatprep.subr.mxu0 0.0
      %580 = vmatpush2.msra.mxu0 0.0
      %581 = vmatprep.subr.mxu0 0.0
      %582 = vmatpush2.msra.mxu0 0.0
      %583 = vmatprep.subr.mxu0 0.0
      %584 = vmatpush2.msra.mxu0 0.0
      %585 = vmatprep.mubr.f32.mxu0 0.0
      %v586 = vand.u32 %v180, 4294901760
      %587 = vmatmul.mubr.f32.gmra.mxu0 %v586
      %v588 = vpop.f32.mrf.mxu0
      %v589 = vadd.f32 %v506, %v588
      %v590 = vpop.f32.mrf.mxu0
      %591 = vdwg.mxu0
      %592 = vmatprep.subr.mxu0 0.0
      %593 = vmatpush1.msra.mxu0 0.0
      %594 = vmatprep.subr.mxu0 0.0
      %595 = vmatpush1.msra.mxu0 0.0
      %596 = vmatprep.subr.mxu0 0.0
      %597 = vmatpush1.msra.mxu0 0.0
      %598 = vmatprep.subr.mxu0 0.0
      %599 = vmatpush1.msra.mxu0 0.0
      %600 = vmatprep.subr.mxu0 0.0
      %601 = vmatpush1.msra.mxu0 0.0
      %602 = vmatprep.subr.mxu0 0.0
      %603 = vmatpush1.msra.mxu0 0.0
      %604 = vmatprep.subr.mxu0 0.0
      %605 = vmatpush1.msra.mxu0 0.0
      %606 = vmatprep.subr.mxu0 0.0
      %607 = vmatpush1.msra.mxu0 0.0
      %608 = vmatprep.subr.mxu0 0.0
      %609 = vmatpush1.msra.mxu0 0.0
      %610 = vmatprep.subr.mxu0 0.0
      %611 = vmatpush1.msra.mxu0 0.0
      %612 = vmatprep.subr.mxu0 0.0
      %613 = vmatpush1.msra.mxu0 0.0
      %614 = vmatprep.subr.mxu0 0.0
      %615 = vmatpush1.msra.mxu0 0.0
      %616 = vmatprep.subr.mxu0 0.0
      %v617 = vand.u32 %v170, 4294901760
      %618 = vmatpush1.msra.mxu0 %v617
      %619 = vmatprep.subr.mxu0 0.0
      %v620 = vand.u32 %v169, 4294901760
      %621 = vmatpush1.msra.mxu0 %v620
      %622 = vmatprep.subr.mxu0 0.0
      %v623 = vand.u32 %v168, 4294901760
      %624 = vmatpush1.msra.mxu0 %v623
      %625 = vmatprep.subr.mxu0 0.0
      %v626 = vand.u32 %v167, 4294901760
      %627 = vmatpush1.msra.mxu0 %v626
      %628 = vmatprep.subr.mxu0 0.0
      %629 = vmatpush2.msra.mxu0 0.0
      %630 = vmatprep.subr.mxu0 0.0
      %631 = vmatpush2.msra.mxu0 0.0
      %632 = vmatprep.subr.mxu0 0.0
      %633 = vmatpush2.msra.mxu0 0.0
      %634 = vmatprep.subr.mxu0 0.0
      %635 = vmatpush2.msra.mxu0 0.0
      %636 = vmatprep.subr.mxu0 0.0
      %637 = vmatpush2.msra.mxu0 0.0
      %638 = vmatprep.subr.mxu0 0.0
      %639 = vmatpush2.msra.mxu0 0.0
      %640 = vmatprep.subr.mxu0 0.0
      %641 = vmatpush2.msra.mxu0 0.0
      %642 = vmatprep.subr.mxu0 0.0
      %643 = vmatpush2.msra.mxu0 0.0
      %644 = vmatprep.subr.mxu0 0.0
      %645 = vmatpush2.msra.mxu0 0.0
      %646 = vmatprep.subr.mxu0 0.0
      %647 = vmatpush2.msra.mxu0 0.0
      %648 = vmatprep.subr.mxu0 0.0
      %649 = vmatpush2.msra.mxu0 0.0
      %650 = vmatprep.subr.mxu0 0.0
      %651 = vmatpush2.msra.mxu0 0.0
      %652 = vmatprep.subr.mxu0 0.0
      %653 = vmatpush2.msra.mxu0 0.0
      %654 = vmatprep.subr.mxu0 0.0
      %655 = vmatpush2.msra.mxu0 0.0
      %656 = vmatprep.subr.mxu0 0.0
      %657 = vmatpush2.msra.mxu0 0.0
      %658 = vmatprep.subr.mxu0 0.0
      %659 = vmatpush2.msra.mxu0 0.0
      %660 = vmatprep.mubr.f32.mxu0 0.0
      %v661 = vand.u32 %v180, 4294901760
      %662 = vmatmul.mubr.f32.gmra.mxu0 %v661
      %v663 = vpop.f32.mrf.mxu0
      %v664 = vadd.f32 %v589, %v663
      %v665 = vpop.f32.mrf.mxu0
      %666 = vdwg.mxu0
      %vm667 = vcmask 48128
      %668 = vst.msk [vmem:[%s165] sm:$0xff] %vm667, %v664
      %p669 = scmp.lt.s32.totalorder %s14, 1
      %s670 = scalar_select %p669, %s14, 1
      %s671 = smul.addr %s670, 8
      %s672 = scalar_lea.vmem %s3, %s671
      // Predicated region
      $region33: #{backbone_update.1} parent=31 // pred_check
        %p673 = pneg %p100
      $region34: #{backbone_update.1} parent=31 // pred_check_branch
        %675 = sbr.rel (%p673) target = $region36
      $region35: #{backbone_update.1} parent=31 // pred_region
        _
      $region36: #{backbone_update.1} parent=31 // pred_fallthru
        _
    $region32: #{backbone_update.1} parent=5 // pred_fallthru
      _
    %p676 = scmp.le.s32.totalorder 2, %s9
    // Predicated region
    $region37: #{backbone_update.1} parent=5 // pred_check
      %p677 = pneg %p676
    $region38: #{backbone_update.1} parent=5 // pred_check_branch
      %679 = sbr.rel (%p677) target = $region40
    $region39: #{backbone_update.1} parent=5 // pred_region
      %s680 = ssub.s32 %s9, 2
      // Predicated region
      $region41: #{backbone_update.1} parent=39 // pred_check
        %p681 = pneg %p106
      $region42: #{backbone_update.1} parent=39 // pred_check_branch
        %683 = sbr.rel (%p681) target = $region44
      $region43: #{backbone_update.1} parent=39 // pred_region
        %p684 = scmp.lt.s32.totalorder %s15, 1
        %s685 = scalar_select %p684, %s15, 1
        %s686 = smul.addr %s685, 8
        %s687 = scalar_lea.vmem %s3, %s686
      $region44: #{backbone_update.1} parent=39 // pred_fallthru
        _
    $region40: #{backbone_update.1} parent=5 // pred_fallthru
      _
  $region6: #{backbone_update.1} parent=0 // loop_footer
    %s13 = sadd.s32 1, %s9
  $region7: #{backbone_update.1} parent=0 // loop_footer_branch
    %8 = sbr.rel target = $region3
  $region8: #{backbone_update.1} parent=0 // loop_exit
    _

</llo_original>
